<compile_context>
chip_gen: v7x
topology: tpu7x:2x2x1
jax: 0.10.0
libtpu: 0.0.40
codegen_flags: <defaults>
</compile_context>

<pallas_src>
import numpy as np
import jax
import jax.numpy as jnp
from jax.experimental import pallas as pl
from jax.experimental.pallas import tpu as pltpu

LANE = 128      # vreg lane width  (last-dim unit)
SUBLANE = 8     # vreg sublane height (second-to-last-dim unit)


def _round_up(x, m):
    return ((x + m - 1) // m) * m


# ----------------------------------------------------------------------------
# Pallas kernel (single invocation, whole problem in VMEM).
#   e_ref  : (Btot + Ltot, D) f32   rows [0, Btot)        = context v-embeddings
#                                   rows [Btot, Btot+Gtot) = group u-embeddings
#                                   rows [Btot+Gtot, ...)  = negative v-embeddings
#   m_ref  : (Ltot, Btot)     f32   +1 block: context -> group (segment sum)
#                                   -1 block: context -> negative row (group ctx
#                                   sum broadcast, sign of logsig(-x) folded in)
#   wt_ref : (Ltot, 128)      f32   column i = loss weights of batch i (0 padded)
#   out_ref: (1, 128)         f32   per-batch losses in lanes 0..NB-1
# ----------------------------------------------------------------------------
def _cbow_loss_kernel(e_ref, m_ref, wt_ref, out_ref):
    def log_sigmoid(x):
        # numerically stable form (safe even without the +-10 clamp)
        return jnp.minimum(x, 0.0) - jnp.log1p(jnp.exp(-jnp.abs(x)))

    ltot, btot = m_ref.shape
    v = e_ref[pl.ds(0, btot), :]            # (Btot, D) context embeddings
    un = e_ref[pl.ds(btot, ltot), :]        # (Ltot, D) [u_groups ; v_neg]

    # One MXU matmul gives, per loss row, the context vector it is scored against:
    #   rows < Gtot : +sum of context v's of that group   (segment sum)
    #   rows >= Gtot: -group context sum of that negative row (sign pre-folded)
    ctx = jnp.dot(m_ref[...], v, preferred_element_type=jnp.float32)   # (Ltot, D)

    score = jnp.sum(un * ctx, axis=1, keepdims=True)                   # (Ltot, 1)
    score = jnp.clip(score, -10.0, 10.0)
    loss_col = -log_sigmoid(score)                                     # (Ltot, 1)

    # Weighted per-batch reduction; Wt folds 1/G, 1/(count*K) and the final mean.
    out_ref[...] = jnp.sum(wt_ref[...] * loss_col, axis=0, keepdims=True)  # (1,128)


def cbow_loss_pallas(E, M, Wt):
    vmem = lambda: pl.BlockSpec(memory_space=pltpu.MemorySpace.VMEM)
    out = pl.pallas_call(
        _cbow_loss_kernel,
        out_shape=jax.ShapeDtypeStruct((1, LANE), jnp.float32),
        in_specs=[vmem(), vmem(), vmem()],
        out_specs=vmem(),
    )(E, M, Wt)
    return out[0]        # (128,) lane-dense row of per-batch losses


# ----------------------------------------------------------------------------
# Host-side glue: reproduces the (data-dependent) python loop of the PyTorch
# forward as dense block-diagonal segment matrices + folded weights, so the
# kernel stays static-shaped and is launched exactly once for all batches.
# ----------------------------------------------------------------------------
def build_group_structure(pos_u_np):
    """Reproduce the PyTorch forward's dedup/count loop.

    NOTE (quirk kept intentionally, shared with the numpy reference): a target id
    that re-appears NON-consecutively still increments counts[-1], i.e. its
    context rows get attributed to the most recent group, exactly like the
    original `for u in emb_u: ... counts[-1] += 1` loop + torch.split.
    """
    B = pos_u_np.shape[0]
    seen, counts, reps = [], [], []
    seg = np.zeros((B,), dtype=np.int32)
    for b in range(B):
        uid = int(pos_u_np[b])
        if any(uid == s for s in seen):
            counts[-1] += 1
        else:
            seen.append(uid)
            counts.append(1)
            reps.append(b)
        seg[b] = len(counts) - 1
    return seg, counts, np.asarray(reps, np.int32)


def pack_batches(pos_u_list, pos_v_list, neg_v_list, K):
    """Fuse NB batches into one block-diagonal problem (M, Wt) + gather indices."""
    # TODO(synk): at production batch sizes replace the dense O(B^2)/O(B*K*B)
    # block-diagonal matrices with PrefetchScalarGridSpec segment offsets + a
    # tiled reduction grid axis, and set vmem_limit_bytes explicitly.
    NB = len(pos_u_list)
    assert NB <= LANE
    B = pos_u_list[0].shape[0]
    BK = B * K
    Bp = _round_up(B, SUBLANE)
    BKp = _round_up(BK, SUBLANE)

    structs = [build_group_structure(pu) for pu in pos_u_list]
    Gp = _round_up(max(len(c) for (_, c, _) in structs), SUBLANE)

    Btot, Gtot, BKtot = NB * Bp, NB * Gp, NB * BKp
    Ltot = Gtot + BKtot

    M = np.zeros((Ltot, Btot), np.float32)
    Wt = np.zeros((Ltot, LANE), np.float32)
    v_ids = np.zeros((Btot,), np.int32)
    u_ids = np.zeros((Gtot,), np.int32)
    neg_ids = np.zeros((BKtot,), np.int32)

    for i, (seg, counts, reps) in enumerate(structs):
        G = len(counts)
        counts_f = np.asarray(counts, np.float64)
        grp = np.repeat(seg, K)                      # group of each flat neg row

        v_ids[i * Bp: i * Bp + B] = pos_v_list[i]
        u_ids[i * Gp: i * Gp + G] = pos_u_list[i][reps]
        neg_ids[i * BKp: i * BKp + BK] = neg_v_list[i].reshape(-1)

        # positive block (+1): context position b -> its group seg[b]
        M[i * Gp + seg, i * Bp + np.arange(B)] = 1.0
        # negative block (-1): context b -> every negative row of the same group
        M[Gtot + i * BKp: Gtot + i * BKp + BK, i * Bp: i * Bp + B] = \
            -(grp[:, None] == seg[None, :]).astype(np.float32)

        # loss weights (column i of Wt collects batch i's loss terms):
        #   positives: 1/G (final mean over groups, minus sign already in kernel)
        #   negatives: 1/(G * count_g * K) (per-group mean over its neg rows * 1/G)
        Wt[i * Gp: i * Gp + G, i] = 1.0 / G
        Wt[Gtot + i * BKp: Gtot + i * BKp + BK, i] = 1.0 / (G * counts_f[grp] * K)

    return (jnp.asarray(M), jnp.asarray(Wt),
            jnp.asarray(v_ids), jnp.asarray(u_ids), jnp.asarray(neg_ids))


@jax.jit
def cbow_forward(U, Wv, v_ids, u_ids, neg_ids, M, Wt):
    """On-device embedding gathers (sparse nn.Embedding lookups) + Pallas loss."""
    E = jnp.concatenate(
        [jnp.take(Wv, v_ids, axis=0),      # (Btot, D)  context v-embeddings
         jnp.take(U, u_ids, axis=0),       # (Gtot, D)  deduped target u-embeddings
         jnp.take(Wv, neg_ids, axis=0)],   # (BKtot, D) negative v-embeddings
        axis=0)
    return cbow_loss_pallas(E, M, Wt)      # (128,) losses in lanes 0..NB-1


# Pure-numpy reference mirroring the PyTorch forward literally (for validation).
def reference_loss(U, Wv, pos_u, pos_v, neg_v):
    emb_u = U[pos_u]                    # (B, D)
    emb_v = Wv[pos_v]                   # (B, D)
    emb_neg_v = Wv[neg_v]               # (B, K, D)
    emb_u_temp, counts = [], []
    for u in emb_u:
        if any((u == u_).all() for u_ in emb_u_temp):
            counts[-1] += 1
        else:
            emb_u_temp.append(u)
            counts.append(1)
    emb_u_g = np.stack(emb_u_temp)
    splits = np.cumsum(counts)[:-1]
    emb_v_g = np.stack([g.sum(axis=0) for g in np.split(emb_v, splits, axis=0)])
    emb_neg_flat = [g.reshape(-1, g.shape[-1]) for g in np.split(emb_neg_v, splits, axis=0)]

    def logsig(x):
        return -np.log1p(np.exp(-x))

    score = np.sum(emb_u_g * emb_v_g, axis=1)
    score = np.clip(score, -10.0, 10.0)
    score = -logsig(score)
    neg_score = []
    for i, v in enumerate(emb_v_g):
        d = emb_neg_flat[i] @ v[:, None]
        d = np.clip(d, -10.0, 10.0)
        neg_score.append(-np.mean(logsig(-d)))
    return np.mean(score + np.asarray(neg_score))


if __name__ == "__main__":
    # small shapes consistent with the module: vocab=50, emb_dim=32, batch=8,
    # 4 negatives; NB=4 independent batches fused into ONE kernel invocation.
    VOCAB, D, B, K, NB = 50, 32, 8, 4, 4

    key = jax.random.PRNGKey(0)
    keys = jax.random.split(key, 2 + 3 * NB)
    initrange = 1.0 / D
    # u_embeddings: uniform(-1/D, 1/D) exactly as in the module's __init__.
    U = jax.random.uniform(keys[0], (VOCAB, D), jnp.float32, -initrange, initrange)
    # NOTE: the module initializes v_embeddings to all zeros (loss would be the
    # constant 2*log(2)); we use a small deterministic uniform init instead so
    # the kernel math is actually exercised. Forward semantics are unchanged.
    Wv = jax.random.uniform(keys[1], (VOCAB, D), jnp.float32, -initrange, initrange)

    pos_u_list, pos_v_list, neg_v_list = [], [], []
    for i in range(NB):
        ku_, kv_, kn_ = keys[2 + 3 * i], keys[3 + 3 * i], keys[4 + 3 * i]
        # sorted small-range targets -> runs of consecutive duplicates (typical CBOW batch)
        pos_u = np.sort(np.asarray(jax.random.randint(ku_, (B,), 0, 6), np.int32))
        pos_v = np.asarray(jax.random.randint(kv_, (B,), 0, VOCAB), np.int32)
        neg_v = np.asarray(jax.random.randint(kn_, (B, K), 0, VOCAB), np.int32)
        pos_u_list.append(pos_u)
        pos_v_list.append(pos_v)
        neg_v_list.append(neg_v)

    M, Wt, v_ids, u_ids, neg_ids = pack_batches(pos_u_list, pos_v_list, neg_v_list, K)

    loss_row = cbow_forward(U, Wv, v_ids, u_ids, neg_ids, M, Wt)
    loss_row = np.asarray(jax.block_until_ready(loss_row))
    losses = loss_row[:NB]

    U_np = np.asarray(U, np.float64)
    Wv_np = np.asarray(Wv, np.float64)
    for i in range(NB):
        ref = reference_loss(U_np, Wv_np, pos_u_list[i], pos_v_list[i], neg_v_list[i])
        if not np.allclose(np.float64(losses[i]), ref, rtol=1e-4, atol=1e-5):
            raise AssertionError(
                f"batch {i} mismatch: pallas={float(losses[i])} ref={float(ref)}")
    print("KERNEL_OK")
</pallas_src>

<mosaic_0001>
module attributes {stable_mosaic.version = 11 : i64} {
  func.func @_cbow_loss_kernel(%arg0: memref<192x32xf32, #tpu.memory_space<vmem>>, %arg1: memref<160x32xf32, #tpu.memory_space<vmem>>, %arg2: memref<160x128xf32, #tpu.memory_space<vmem>>, %arg3: memref<1x128xf32, #tpu.memory_space<vmem>>) attributes {dimension_semantics = [], scalar_prefetch = 0 : i64, scratch_operands = 0 : i64, tpu.core_type = #tpu.core_type<tc>} {
    %c0 = arith.constant 0 : index
    %c0_0 = arith.constant 0 : index
    %0 = vector.load %arg0[%c0, %c0_0] : memref<192x32xf32, #tpu.memory_space<vmem>>, vector<32x32xf32>
    %c32 = arith.constant 32 : index
    %c0_1 = arith.constant 0 : index
    %1 = vector.load %arg0[%c32, %c0_1] : memref<192x32xf32, #tpu.memory_space<vmem>>, vector<160x32xf32>
    %c0_2 = arith.constant 0 : index
    %c0_3 = arith.constant 0 : index
    %2 = vector.load %arg1[%c0_2, %c0_3] : memref<160x32xf32, #tpu.memory_space<vmem>>, vector<160x32xf32>
    %cst = arith.constant dense<0.000000e+00> : vector<160x32xf32>
    %3 = tpu.matmul %2, %0, %cst {dimension_numbers = #tpu.dot_dimension_numbers<[1], [0], [0], [1], [0, 0, 1, 1], [], []>} : vector<160x32xf32>, vector<32x32xf32>, vector<160x32xf32> -> vector<160x32xf32>
    %4 = arith.mulf %1, %3 : vector<160x32xf32>
    %cst_4 = arith.constant dense<0.000000e+00> : vector<160xf32>
    %5 = vector.multi_reduction <add>, %4, %cst_4 [1] : vector<160x32xf32> to vector<160xf32>
    %6 = vector.shape_cast %5 : vector<160xf32> to vector<160x1xf32>
    %cst_5 = arith.constant -1.000000e+01 : f32
    %cst_6 = arith.constant 1.000000e+01 : f32
    %7 = vector.broadcast %cst_5 : f32 to vector<160x1xf32>
    %8 = arith.maximumf %7, %6 : vector<160x1xf32>
    %9 = vector.broadcast %cst_6 : f32 to vector<160x1xf32>
    %10 = arith.minimumf %9, %8 : vector<160x1xf32>
    %cst_7 = arith.constant 0.000000e+00 : f32
    %11 = vector.broadcast %cst_7 : f32 to vector<160x1xf32>
    %12 = arith.minimumf %10, %11 : vector<160x1xf32>
    %13 = math.absf %10 : vector<160x1xf32>
    %cst_8 = arith.constant 0.000000e+00 : f32
    %14 = vector.broadcast %cst_8 : f32 to vector<160x1xf32>
    %15 = arith.subf %14, %13 : vector<160x1xf32>
    %16 = math.exp %15 : vector<160x1xf32>
    %17 = math.log1p %16 : vector<160x1xf32>
    %18 = arith.subf %12, %17 : vector<160x1xf32>
    %cst_9 = arith.constant 0.000000e+00 : f32
    %19 = vector.broadcast %cst_9 : f32 to vector<160x1xf32>
    %20 = arith.subf %19, %18 : vector<160x1xf32>
    %c0_10 = arith.constant 0 : index
    %c0_11 = arith.constant 0 : index
    %21 = vector.load %arg2[%c0_10, %c0_11] : memref<160x128xf32, #tpu.memory_space<vmem>>, vector<160x128xf32>
    %22 = vector.broadcast %20 : vector<160x1xf32> to vector<160x128xf32>
    %23 = arith.mulf %21, %22 : vector<160x128xf32>
    %cst_12 = arith.constant dense<0.000000e+00> : vector<128xf32>
    %24 = vector.multi_reduction <add>, %23, %cst_12 [0] : vector<160x128xf32> to vector<128xf32>
    %25 = vector.shape_cast %24 : vector<128xf32> to vector<1x128xf32>
    %c0_13 = arith.constant 0 : index
    %c0_14 = arith.constant 0 : index
    %26 = vector.load %arg3[%c0_13, %c0_14] : memref<1x128xf32, #tpu.memory_space<vmem>>, vector<1x128xf32>
    tpu.vector_store %arg3[%c0_13, %c0_14], %25 {strides = array<i32>} : memref<1x128xf32, #tpu.memory_space<vmem>>, vector<1x128xf32>,
    return
  }
}

</mosaic_0001>

<llo_original>
// kernel: cbow_forward.1
$region0: #{cbow_forward.1}
  #allocation0 [shape = 'u32[]', space=smem, size = 0x4, offset = 0x4, fixed_abs, tag = 'smem constant byte address 0x4 - core index']
  #allocation1 [shape = 'u32[144,128]{1,0:T(1,128)}', space=vmem, size = 0x12000, scoped, tag = 'internal scratch']
  %s0 = inlined_call_operand.vmem [shape: f32[192,32], index: 0, kind: input, shape index: {}]
  %s1 = inlined_call_operand.vmem [shape: f32[160,32], index: 1, kind: input, shape index: {}]
  %s2 = inlined_call_operand.vmem [shape: f32[160,128], index: 2, kind: input, shape index: {}]
  %s3 = inlined_call_operand.hbm [shape: f32[1,128], index: 3, kind: output, shape index: {}]
  %s4 = sld [smem:[#allocation0]]
  $region22: #{cbow_forward.1} parent=0
    _
  %s6 = ssub.s32 1, %s4
  %s7 = scalar_select 0, %s6, %s4
  $region1: #{cbow_forward.1} parent=0
    #allocation2 [shape = 'u8[512]{0}', space=vmem, size = 0x400, scoped, tag = 'output window, operand 0, single buffered']
    #allocation3 [shape = 's32[1]{0}', space=sflag, size = 0x4, scoped, tag = 'scoped memory for cbow_forward.1']
    %8 = vsyncpa [#allocation3], 0
    // Predicated region
    $region2: #{cbow_forward.1} parent=1 // pred_check
      _
    $region3: #{cbow_forward.1} parent=1 // pred_check_branch
      %10 = sbr.rel (0) target = $region5
    $region4: #{cbow_forward.1} parent=1 // pred_region
      _
    $region5: #{cbow_forward.1} parent=1 // pred_fallthru
      _
    // Predicated region
    $region6: #{cbow_forward.1} parent=1 // pred_check
      _
    $region7: #{cbow_forward.1} parent=1 // pred_check_branch
      %12 = sbr.rel (0) target = $region9
    $region8: #{cbow_forward.1} parent=1 // pred_region
      _
    $region9: #{cbow_forward.1} parent=1 // pred_fallthru
      _
    // Predicated region
    $region10: #{cbow_forward.1} parent=1 // pred_check
      _
    $region11: #{cbow_forward.1} parent=1 // pred_check_branch
      %14 = sbr.rel (0) target = $region13
    $region12: #{cbow_forward.1} parent=1 // pred_region
      _
    $region13: #{cbow_forward.1} parent=1 // pred_fallthru
      _
    %v15 = vld [vmem:[%s0] sm:$0xff]
    %v16 = vld [vmem:[%s0 + $0x8] sm:$0xff]
    %v17 = vld [vmem:[%s0 + $0x10] sm:$0xff]
    %v18 = vld [vmem:[%s0 + $0x18] sm:$0xff]
    %v19 = vld [vmem:[%s0 + $0x20] sm:$0xff]
    %v20 = vld [vmem:[%s0 + $0x28] sm:$0xff]
    %v21 = vld [vmem:[%s0 + $0x30] sm:$0xff]
    %v22 = vld [vmem:[%s0 + $0x38] sm:$0xff]
    %v23 = vld [vmem:[%s0 + $0x40] sm:$0xff]
    %v24 = vld [vmem:[%s0 + $0x48] sm:$0xff]
    %v25 = vld [vmem:[%s0 + $0x50] sm:$0xff]
    %v26 = vld [vmem:[%s0 + $0x58] sm:$0xff]
    %v27 = vld [vmem:[%s0 + $0x60] sm:$0xff]
    %v28 = vld [vmem:[%s0 + $0x68] sm:$0xff]
    %v29 = vld [vmem:[%s0 + $0x70] sm:$0xff]
    %v30 = vld [vmem:[%s0 + $0x78] sm:$0xff]
    %v31 = vld [vmem:[%s0 + $0x80] sm:$0xff]
    %v32 = vld [vmem:[%s0 + $0x88] sm:$0xff]
    %v33 = vld [vmem:[%s0 + $0x90] sm:$0xff]
    %v34 = vld [vmem:[%s0 + $0x98] sm:$0xff]
    %v35 = vld [vmem:[%s0 + $0xa0] sm:$0xff]
    %v36 = vld [vmem:[%s0 + $0xa8] sm:$0xff]
    %v37 = vld [vmem:[%s0 + $0xb0] sm:$0xff]
    %v38 = vld [vmem:[%s0 + $0xb8] sm:$0xff]
    %v39 = vld [vmem:[%s1] sm:$0xff]
    %v40 = vld [vmem:[%s1 + $0x8] sm:$0xff]
    %v41 = vld [vmem:[%s1 + $0x10] sm:$0xff]
    %v42 = vld [vmem:[%s1 + $0x18] sm:$0xff]
    %v43 = vld [vmem:[%s1 + $0x20] sm:$0xff]
    %v44 = vld [vmem:[%s1 + $0x28] sm:$0xff]
    %v45 = vld [vmem:[%s1 + $0x30] sm:$0xff]
    %v46 = vld [vmem:[%s1 + $0x38] sm:$0xff]
    %v47 = vld [vmem:[%s1 + $0x40] sm:$0xff]
    %v48 = vld [vmem:[%s1 + $0x48] sm:$0xff]
    %v49 = vld [vmem:[%s1 + $0x50] sm:$0xff]
    %v50 = vld [vmem:[%s1 + $0x58] sm:$0xff]
    %v51 = vld [vmem:[%s1 + $0x60] sm:$0xff]
    %v52 = vld [vmem:[%s1 + $0x68] sm:$0xff]
    %v53 = vld [vmem:[%s1 + $0x70] sm:$0xff]
    %v54 = vld [vmem:[%s1 + $0x78] sm:$0xff]
    %v55 = vld [vmem:[%s1 + $0x80] sm:$0xff]
    %v56 = vld [vmem:[%s1 + $0x88] sm:$0xff]
    %v57 = vld [vmem:[%s1 + $0x90] sm:$0xff]
    %v58 = vld [vmem:[%s1 + $0x98] sm:$0xff]
    %vm59 = vcmask 261120
    %v61 = vsel %vm59, %v39, 0
    %v64 = vsel %vm59, %v40, 0
    %v67 = vsel %vm59, %v41, 0
    %v70 = vsel %vm59, %v42, 0
    %v73 = vsel %vm59, %v43, 0
    %v76 = vsel %vm59, %v44, 0
    %v79 = vsel %vm59, %v45, 0
    %v82 = vsel %vm59, %v46, 0
    %v85 = vsel %vm59, %v47, 0
    %v88 = vsel %vm59, %v48, 0
    %v91 = vsel %vm59, %v49, 0
    %v94 = vsel %vm59, %v50, 0
    %v97 = vsel %vm59, %v51, 0
    %v100 = vsel %vm59, %v52, 0
    %v103 = vsel %vm59, %v53, 0
    %v106 = vsel %vm59, %v54, 0
    %v109 = vsel %vm59, %v55, 0
    %v112 = vsel %vm59, %v56, 0
    %v115 = vsel %vm59, %v57, 0
    %v118 = vsel %vm59, %v58, 0
    %120 = vmatprep.subr.mxu0 0.0
    %121 = vmatpush1.msra.mxu0 %v15
    %122 = vmatprep.subr.mxu0 0.0
    %123 = vmatpush1.msra.mxu0 %v16
    %124 = vmatprep.subr.mxu0 0.0
    %125 = vmatpush1.msra.mxu0 %v17
    %126 = vmatprep.subr.mxu0 0.0
    %127 = vmatpush1.msra.mxu0 %v18
    %128 = vmatprep.subr.mxu0 0.0
    %129 = vmatpush1.msra.mxu0 0.0
    %130 = vmatprep.subr.mxu0 0.0
    %131 = vmatpush1.msra.mxu0 0.0
    %132 = vmatprep.subr.mxu0 0.0
    %133 = vmatpush1.msra.mxu0 0.0
    %134 = vmatprep.subr.mxu0 0.0
    %135 = vmatpush1.msra.mxu0 0.0
    %136 = vmatprep.subr.mxu0 0.0
    %137 = vmatpush1.msra.mxu0 0.0
    %138 = vmatprep.subr.mxu0 0.0
    %139 = vmatpush1.msra.mxu0 0.0
    %140 = vmatprep.subr.mxu0 0.0
    %141 = vmatpush1.msra.mxu0 0.0
    %142 = vmatprep.subr.mxu0 0.0
    %143 = vmatpush1.msra.mxu0 0.0
    %144 = vmatprep.subr.mxu0 0.0
    %145 = vmatpush1.msra.mxu0 0.0
    %146 = vmatprep.subr.mxu0 0.0
    %147 = vmatpush1.msra.mxu0 0.0
    %148 = vmatprep.subr.mxu0 0.0
    %149 = vmatpush1.msra.mxu0 0.0
    %150 = vmatprep.subr.mxu0 0.0
    %151 = vmatpush1.msra.mxu0 0.0
    %152 = vmatprep.subr.mxu0 0.0
    %153 = vmatpush1.msra.mxu0 0.0
    %154 = vmatprep.subr.mxu0 0.0
    %155 = vmatpush1.msra.mxu0 0.0
    %156 = vmatprep.subr.mxu0 0.0
    %157 = vmatpush1.msra.mxu0 0.0
    %158 = vmatprep.subr.mxu0 0.0
    %159 = vmatpush1.msra.mxu0 0.0
    %160 = vmatprep.subr.mxu0 0.0
    %161 = vmatpush1.msra.mxu0 0.0
    %162 = vmatprep.subr.mxu0 0.0
    %163 = vmatpush1.msra.mxu0 0.0
    %164 = vmatprep.subr.mxu0 0.0
    %165 = vmatpush1.msra.mxu0 0.0
    %166 = vmatprep.subr.mxu0 0.0
    %167 = vmatpush1.msra.mxu0 0.0
    %168 = vmatprep.subr.mxu0 0.0
    %169 = vmatpush1.msra.mxu0 0.0
    %170 = vmatprep.subr.mxu0 0.0
    %171 = vmatpush1.msra.mxu0 0.0
    %172 = vmatprep.subr.mxu0 0.0
    %173 = vmatpush1.msra.mxu0 0.0
    %174 = vmatprep.subr.mxu0 0.0
    %175 = vmatpush1.msra.mxu0 0.0
    %176 = vmatprep.subr.mxu0 0.0
    %177 = vmatpush1.msra.mxu0 0.0
    %178 = vmatprep.subr.mxu0 0.0
    %179 = vmatpush1.msra.mxu0 0.0
    %180 = vmatprep.subr.mxu0 0.0
    %181 = vmatpush1.msra.mxu0 0.0
    %182 = vmatprep.subr.mxu0 0.0
    %183 = vmatpush1.msra.mxu0 0.0
    %184 = vmatprep.mubr.f32.mxu0 0.0
    %185 = vmatmul.mubr.f32.gmra.mrb[0].mxu0 %v61
    %v186 = vpop.f32.mrb[0].mxu0
    %v187 = vadd.f32 0.0, %v186
    %v188 = vpop.f32.mrb[0].mxu0
    %189 = vmatprep.mubr.f32.mxu0 0.0
    %190 = vmatmul.mubr.f32.gmra.mrb[0].mxu0 %v64
    %v191 = vpop.f32.mrb[0].mxu0
    %v192 = vadd.f32 0.0, %v191
    %v193 = vpop.f32.mrb[0].mxu0
    %194 = vmatprep.mubr.f32.mxu0 0.0
    %195 = vmatmul.mubr.f32.gmra.mrb[0].mxu0 %v67
    %v196 = vpop.f32.mrb[0].mxu0
    %v197 = vadd.f32 0.0, %v196
    %v198 = vpop.f32.mrb[0].mxu0
    %199 = vmatprep.mubr.f32.mxu0 0.0
    %200 = vmatmul.mubr.f32.gmra.mrb[0].mxu0 %v70
    %v201 = vpop.f32.mrb[0].mxu0
    %v202 = vadd.f32 0.0, %v201
    %v203 = vpop.f32.mrb[0].mxu0
    %204 = vmatprep.mubr.f32.mxu0 0.0
    %205 = vmatmul.mubr.f32.gmra.mrb[0].mxu0 %v73
    %v206 = vpop.f32.mrb[0].mxu0
    %v207 = vadd.f32 0.0, %v206
    %v208 = vpop.f32.mrb[0].mxu0
    %209 = vmatprep.mubr.f32.mxu0 0.0
    %210 = vmatmul.mubr.f32.gmra.mrb[0].mxu0 %v76
    %v211 = vpop.f32.mrb[0].mxu0
    %v212 = vadd.f32 0.0, %v211
    %v213 = vpop.f32.mrb[0].mxu0
    %214 = vmatprep.mubr.f32.mxu0 0.0
    %215 = vmatmul.mubr.f32.gmra.mrb[0].mxu0 %v79
    %v216 = vpop.f32.mrb[0].mxu0
    %v217 = vadd.f32 0.0, %v216
    %v218 = vpop.f32.mrb[0].mxu0
    %219 = vmatprep.mubr.f32.mxu0 0.0
    %220 = vmatmul.mubr.f32.gmra.mrb[0].mxu0 %v82
    %v221 = vpop.f32.mrb[0].mxu0
    %v222 = vadd.f32 0.0, %v221
    %v223 = vpop.f32.mrb[0].mxu0
    %224 = vmatprep.mubr.f32.mxu0 0.0
    %225 = vmatmul.mubr.f32.gmra.mrb[0].mxu0 %v85
    %v226 = vpop.f32.mrb[0].mxu0
    %v227 = vadd.f32 0.0, %v226
    %v228 = vpop.f32.mrb[0].mxu0
    %229 = vmatprep.mubr.f32.mxu0 0.0
    %230 = vmatmul.mubr.f32.gmra.mrb[0].mxu0 %v88
    %v231 = vpop.f32.mrb[0].mxu0
    %v232 = vadd.f32 0.0, %v231
    %v233 = vpop.f32.mrb[0].mxu0
    %234 = vmatprep.mubr.f32.mxu0 0.0
    %235 = vmatmul.mubr.f32.gmra.mrb[0].mxu0 %v91
    %v236 = vpop.f32.mrb[0].mxu0
    %v237 = vadd.f32 0.0, %v236
    %v238 = vpop.f32.mrb[0].mxu0
    %239 = vmatprep.mubr.f32.mxu0 0.0
    %240 = vmatmul.mubr.f32.gmra.mrb[0].mxu0 %v94
    %v241 = vpop.f32.mrb[0].mxu0
    %v242 = vadd.f32 0.0, %v241
    %v243 = vpop.f32.mrb[0].mxu0
    %244 = vmatprep.mubr.f32.mxu0 0.0
    %245 = vmatmul.mubr.f32.gmra.mrb[0].mxu0 %v97
    %v246 = vpop.f32.mrb[0].mxu0
    %v247 = vadd.f32 0.0, %v246
    %v248 = vpop.f32.mrb[0].mxu0
    %249 = vmatprep.mubr.f32.mxu0 0.0
    %250 = vmatmul.mubr.f32.gmra.mrb[0].mxu0 %v100
    %v251 = vpop.f32.mrb[0].mxu0
    %v252 = vadd.f32 0.0, %v251
    %v253 = vpop.f32.mrb[0].mxu0
    %254 = vmatprep.mubr.f32.mxu0 0.0
    %255 = vmatmul.mubr.f32.gmra.mrb[0].mxu0 %v103
    %v256 = vpop.f32.mrb[0].mxu0
    %v257 = vadd.f32 0.0, %v256
    %v258 = vpop.f32.mrb[0].mxu0
    %259 = vmatprep.mubr.f32.mxu0 0.0
    %260 = vmatmul.mubr.f32.gmra.mrb[0].mxu0 %v106
    %v261 = vpop.f32.mrb[0].mxu0
    %v262 = vadd.f32 0.0, %v261
    %v263 = vpop.f32.mrb[0].mxu0
    %264 = vmatprep.mubr.f32.mxu0 0.0
    %265 = vmatmul.mubr.f32.gmra.mrb[0].mxu0 %v109
    %v266 = vpop.f32.mrb[0].mxu0
    %v267 = vadd.f32 0.0, %v266
    %v268 = vpop.f32.mrb[0].mxu0
    %269 = vmatprep.mubr.f32.mxu0 0.0
    %270 = vmatmul.mubr.f32.gmra.mrb[0].mxu0 %v112
    %v271 = vpop.f32.mrb[0].mxu0
    %v272 = vadd.f32 0.0, %v271
    %v273 = vpop.f32.mrb[0].mxu0
    %274 = vmatprep.mubr.f32.mxu0 0.0
    %275 = vmatmul.mubr.f32.gmra.mrb[0].mxu0 %v115
    %v276 = vpop.f32.mrb[0].mxu0
    %v277 = vadd.f32 0.0, %v276
    %v278 = vpop.f32.mrb[0].mxu0
    %279 = vmatprep.mubr.f32.mxu0 0.0
    %280 = vmatmul.mubr.f32.gmra.mrb[0].mxu0 %v118
    %v281 = vpop.f32.mrb[0].mxu0
    %v282 = vadd.f32 0.0, %v281
    %v283 = vpop.f32.mrb[0].mxu0
    %284 = vdwg.mxu0
    %v285 = vmul.f32 %v19, %v187
    %v286 = vmul.f32 %v20, %v192
    %v287 = vmul.f32 %v21, %v197
    %v288 = vmul.f32 %v22, %v202
    %v289 = vmul.f32 %v23, %v207
    %v290 = vmul.f32 %v24, %v212
    %v291 = vmul.f32 %v25, %v217
    %v292 = vmul.f32 %v26, %v222
    %v293 = vmul.f32 %v27, %v227
    %v294 = vmul.f32 %v28, %v232
    %v295 = vmul.f32 %v29, %v237
    %v296 = vmul.f32 %v30, %v242
    %v297 = vmul.f32 %v31, %v247
    %v298 = vmul.f32 %v32, %v252
    %v299 = vmul.f32 %v33, %v257
    %v300 = vmul.f32 %v34, %v262
    %v301 = vmul.f32 %v35, %v267
    %v302 = vmul.f32 %v36, %v272
    %v303 = vmul.f32 %v37, %v277
    %v304 = vmul.f32 %v38, %v282
    %v305 = vsel %vm59, %v285, 0.0
    %306 = vadd.xlane.f32.xlu0 %v305
    %v307 = vpop.xlane.xlu0 %306
    %v308 = vsel %vm59, %v286, 0.0
    %309 = vadd.xlane.f32.xlu0 %v308
    %v310 = vpop.xlane.xlu0 %309
    %v311 = vsel %vm59, %v287, 0.0
    %312 = vadd.xlane.f32.xlu0 %v311
    %v313 = vpop.xlane.xlu0 %312
    %v314 = vsel %vm59, %v288, 0.0
    %315 = vadd.xlane.f32.xlu0 %v314
    %v316 = vpop.xlane.xlu0 %315
    %v317 = vsel %vm59, %v289, 0.0
    %318 = vadd.xlane.f32.xlu0 %v317
    %v319 = vpop.xlane.xlu0 %318
    %v320 = vsel %vm59, %v290, 0.0
    %321 = vadd.xlane.f32.xlu0 %v320
    %v322 = vpop.xlane.xlu0 %321
    %v323 = vsel %vm59, %v291, 0.0
    %324 = vadd.xlane.f32.xlu0 %v323
    %v325 = vpop.xlane.xlu0 %324
    %v326 = vsel %vm59, %v292, 0.0
    %327 = vadd.xlane.f32.xlu0 %v326
    %v328 = vpop.xlane.xlu0 %327
    %v329 = vsel %vm59, %v293, 0.0
    %330 = vadd.xlane.f32.xlu0 %v329
    %v331 = vpop.xlane.xlu0 %330
    %v332 = vsel %vm59, %v294, 0.0
    %333 = vadd.xlane.f32.xlu0 %v332
    %v334 = vpop.xlane.xlu0 %333
    %v335 = vsel %vm59, %v295, 0.0
    %336 = vadd.xlane.f32.xlu0 %v335
    %v337 = vpop.xlane.xlu0 %336
    %v338 = vsel %vm59, %v296, 0.0
    %339 = vadd.xlane.f32.xlu0 %v338
    %v340 = vpop.xlane.xlu0 %339
    %v341 = vsel %vm59, %v297, 0.0
    %342 = vadd.xlane.f32.xlu0 %v341
    %v343 = vpop.xlane.xlu0 %342
    %v344 = vsel %vm59, %v298, 0.0
    %345 = vadd.xlane.f32.xlu0 %v344
    %v346 = vpop.xlane.xlu0 %345
    %v347 = vsel %vm59, %v299, 0.0
    %348 = vadd.xlane.f32.xlu0 %v347
    %v349 = vpop.xlane.xlu0 %348
    %v350 = vsel %vm59, %v300, 0.0
    %351 = vadd.xlane.f32.xlu0 %v350
    %v352 = vpop.xlane.xlu0 %351
    %v353 = vsel %vm59, %v301, 0.0
    %354 = vadd.xlane.f32.xlu0 %v353
    %v355 = vpop.xlane.xlu0 %354
    %v356 = vsel %vm59, %v302, 0.0
    %357 = vadd.xlane.f32.xlu0 %v356
    %v358 = vpop.xlane.xlu0 %357
    %v359 = vsel %vm59, %v303, 0.0
    %360 = vadd.xlane.f32.xlu0 %v359
    %v361 = vpop.xlane.xlu0 %360
    %v362 = vsel %vm59, %v304, 0.0
    %363 = vadd.xlane.f32.xlu0 %v362
    %v364 = vpop.xlane.xlu0 %363
    %v365 = vmax.f32 %v307, -10.0
    %v366 = vmax.f32 %v310, -10.0
    %v367 = vmax.f32 %v313, -10.0
    %v368 = vmax.f32 %v316, -10.0
    %v369 = vmax.f32 %v319, -10.0
    %v370 = vmax.f32 %v322, -10.0
    %v371 = vmax.f32 %v325, -10.0
    %v372 = vmax.f32 %v328, -10.0
    %v373 = vmax.f32 %v331, -10.0
    %v374 = vmax.f32 %v334, -10.0
    %v375 = vmax.f32 %v337, -10.0
    %v376 = vmax.f32 %v340, -10.0
    %v377 = vmax.f32 %v343, -10.0
    %v378 = vmax.f32 %v346, -10.0
    %v379 = vmax.f32 %v349, -10.0
    %v380 = vmax.f32 %v352, -10.0
    %v381 = vmax.f32 %v355, -10.0
    %v382 = vmax.f32 %v358, -10.0
    %v383 = vmax.f32 %v361, -10.0
    %v384 = vmax.f32 %v364, -10.0
    %v385 = vmin.f32 %v365, 10.0
    %v386 = vmin.f32 %v366, 10.0
    %v387 = vmin.f32 %v367, 10.0
    %v388 = vmin.f32 %v368, 10.0
    %v389 = vmin.f32 %v369, 10.0
    %v390 = vmin.f32 %v370, 10.0
    %v391 = vmin.f32 %v371, 10.0
    %v392 = vmin.f32 %v372, 10.0
    %v393 = vmin.f32 %v373, 10.0
    %v394 = vmin.f32 %v374, 10.0
    %v395 = vmin.f32 %v375, 10.0
    %v396 = vmin.f32 %v376, 10.0
    %v397 = vmin.f32 %v377, 10.0
    %v398 = vmin.f32 %v378, 10.0
    %v399 = vmin.f32 %v379, 10.0
    %v400 = vmin.f32 %v380, 10.0
    %v401 = vmin.f32 %v381, 10.0
    %v402 = vmin.f32 %v382, 10.0
    %v403 = vmin.f32 %v383, 10.0
    %v404 = vmin.f32 %v384, 10.0
    %v405 = vmin.f32 %v385, 0.0
    %v406 = vmin.f32 %v386, 0.0
    %v407 = vmin.f32 %v387, 0.0
    %v408 = vmin.f32 %v388, 0.0
    %v409 = vmin.f32 %v389, 0.0
    %v410 = vmin.f32 %v390, 0.0
    %v411 = vmin.f32 %v391, 0.0
    %v412 = vmin.f32 %v392, 0.0
    %v413 = vmin.f32 %v393, 0.0
    %v414 = vmin.f32 %v394, 0.0
    %v415 = vmin.f32 %v395, 0.0
    %v416 = vmin.f32 %v396, 0.0
    %v417 = vmin.f32 %v397, 0.0
    %v418 = vmin.f32 %v398, 0.0
    %v419 = vmin.f32 %v399, 0.0
    %v420 = vmin.f32 %v400, 0.0
    %v421 = vmin.f32 %v401, 0.0
    %v422 = vmin.f32 %v402, 0.0
    %v423 = vmin.f32 %v403, 0.0
    %v424 = vmin.f32 %v404, 0.0
    %v425 = vand.u32 2147483647, %v385
    %v426 = vand.u32 2147483647, %v386
    %v427 = vand.u32 2147483647, %v387
    %v428 = vand.u32 2147483647, %v388
    %v429 = vand.u32 2147483647, %v389
    %v430 = vand.u32 2147483647, %v390
    %v431 = vand.u32 2147483647, %v391
    %v432 = vand.u32 2147483647, %v392
    %v433 = vand.u32 2147483647, %v393
    %v434 = vand.u32 2147483647, %v394
    %v435 = vand.u32 2147483647, %v395
    %v436 = vand.u32 2147483647, %v396
    %v437 = vand.u32 2147483647, %v397
    %v438 = vand.u32 2147483647, %v398
    %v439 = vand.u32 2147483647, %v399
    %v440 = vand.u32 2147483647, %v400
    %v441 = vand.u32 2147483647, %v401
    %v442 = vand.u32 2147483647, %v402
    %v443 = vand.u32 2147483647, %v403
    %v444 = vand.u32 2147483647, %v404
    %v445 = vsub.f32 0.0, %v425
    %v446 = vsub.f32 0.0, %v426
    %v447 = vsub.f32 0.0, %v427
    %v448 = vsub.f32 0.0, %v428
    %v449 = vsub.f32 0.0, %v429
    %v450 = vsub.f32 0.0, %v430
    %v451 = vsub.f32 0.0, %v431
    %v452 = vsub.f32 0.0, %v432
    %v453 = vsub.f32 0.0, %v433
    %v454 = vsub.f32 0.0, %v434
    %v455 = vsub.f32 0.0, %v435
    %v456 = vsub.f32 0.0, %v436
    %v457 = vsub.f32 0.0, %v437
    %v458 = vsub.f32 0.0, %v438
    %v459 = vsub.f32 0.0, %v439
    %v460 = vsub.f32 0.0, %v440
    %v461 = vsub.f32 0.0, %v441
    %v462 = vsub.f32 0.0, %v442
    %v463 = vsub.f32 0.0, %v443
    %v464 = vsub.f32 0.0, %v444
    %v465 = vmul.f32 %v445, 1.442695
    %v466 = vpow.pop %v465
    %v467 = vmul.f32 %v446, 1.442695
    %v468 = vpow.pop %v467
    %v469 = vmul.f32 %v447, 1.442695
    %v470 = vpow.pop %v469
    %v471 = vmul.f32 %v448, 1.442695
    %v472 = vpow.pop %v471
    %v473 = vmul.f32 %v449, 1.442695
    %v474 = vpow.pop %v473
    %v475 = vmul.f32 %v450, 1.442695
    %v476 = vpow.pop %v475
    %v477 = vmul.f32 %v451, 1.442695
    %v478 = vpow.pop %v477
    %v479 = vmul.f32 %v452, 1.442695
    %v480 = vpow.pop %v479
    %v481 = vmul.f32 %v453, 1.442695
    %v482 = vpow.pop %v481
    %v483 = vmul.f32 %v454, 1.442695
    %v484 = vpow.pop %v483
    %v485 = vmul.f32 %v455, 1.442695
    %v486 = vpow.pop %v485
    %v487 = vmul.f32 %v456, 1.442695
    %v488 = vpow.pop %v487
    %v489 = vmul.f32 %v457, 1.442695
    %v490 = vpow.pop %v489
    %v491 = vmul.f32 %v458, 1.442695
    %v492 = vpow.pop %v491
    %v493 = vmul.f32 %v459, 1.442695
    %v494 = vpow.pop %v493
    %v495 = vmul.f32 %v460, 1.442695
    %v496 = vpow.pop %v495
    %v497 = vmul.f32 %v461, 1.442695
    %v498 = vpow.pop %v497
    %v499 = vmul.f32 %v462, 1.442695
    %v500 = vpow.pop %v499
    %v501 = vmul.f32 %v463, 1.442695
    %v502 = vpow.pop %v501
    %v503 = vmul.f32 %v464, 1.442695
    %v504 = vpow.pop %v503
    %v505 = vadd.f32 %v466, 1.0
    %v506 = vlog2.pop %v505
    %v507 = vmul.f32 %v506, 0.6931472
    %v508 = vmul.f32 -0.5, %v466
    %v509 = vadd.f32 %v508, 1.0
    %v510 = vmul.f32 %v509, %v466
    %v511 = vand.u32 2147483647, %v466
    %vm512 = vcmp.lt.f32.partialorder %v511, 0.0004427343
    %v513 = vsel %vm512, %v510, %v507
    %v514 = vadd.f32 %v468, 1.0
    %v515 = vlog2.pop %v514
    %v516 = vmul.f32 %v515, 0.6931472
    %v517 = vmul.f32 -0.5, %v468
    %v518 = vadd.f32 %v517, 1.0
    %v519 = vmul.f32 %v518, %v468
    %v520 = vand.u32 2147483647, %v468
    %vm521 = vcmp.lt.f32.partialorder %v520, 0.0004427343
    %v522 = vsel %vm521, %v519, %v516
    %v523 = vadd.f32 %v470, 1.0
    %v524 = vlog2.pop %v523
    %v525 = vmul.f32 %v524, 0.6931472
    %v526 = vmul.f32 -0.5, %v470
    %v527 = vadd.f32 %v526, 1.0
    %v528 = vmul.f32 %v527, %v470
    %v529 = vand.u32 2147483647, %v470
    %vm530 = vcmp.lt.f32.partialorder %v529, 0.0004427343
    %v531 = vsel %vm530, %v528, %v525
    %v532 = vadd.f32 %v472, 1.0
    %v533 = vlog2.pop %v532
    %v534 = vmul.f32 %v533, 0.6931472
    %v535 = vmul.f32 -0.5, %v472
    %v536 = vadd.f32 %v535, 1.0
    %v537 = vmul.f32 %v536, %v472
    %v538 = vand.u32 2147483647, %v472
    %vm539 = vcmp.lt.f32.partialorder %v538, 0.0004427343
    %v540 = vsel %vm539, %v537, %v534
    %v541 = vadd.f32 %v474, 1.0
    %v542 = vlog2.pop %v541
    %v543 = vmul.f32 %v542, 0.6931472
    %v544 = vmul.f32 -0.5, %v474
    %v545 = vadd.f32 %v544, 1.0
    %v546 = vmul.f32 %v545, %v474
    %v547 = vand.u32 2147483647, %v474
    %vm548 = vcmp.lt.f32.partialorder %v547, 0.0004427343
    %v549 = vsel %vm548, %v546, %v543
    %v550 = vadd.f32 %v476, 1.0
    %v551 = vlog2.pop %v550
    %v552 = vmul.f32 %v551, 0.6931472
    %v553 = vmul.f32 -0.5, %v476
    %v554 = vadd.f32 %v553, 1.0
    %v555 = vmul.f32 %v554, %v476
    %v556 = vand.u32 2147483647, %v476
    %vm557 = vcmp.lt.f32.partialorder %v556, 0.0004427343
    %v558 = vsel %vm557, %v555, %v552
    %v559 = vadd.f32 %v478, 1.0
    %v560 = vlog2.pop %v559
    %v561 = vmul.f32 %v560, 0.6931472
    %v562 = vmul.f32 -0.5, %v478
    %v563 = vadd.f32 %v562, 1.0
    %v564 = vmul.f32 %v563, %v478
    %v565 = vand.u32 2147483647, %v478
    %vm566 = vcmp.lt.f32.partialorder %v565, 0.0004427343
    %v567 = vsel %vm566, %v564, %v561
    %v568 = vadd.f32 %v480, 1.0
    %v569 = vlog2.pop %v568
    %v570 = vmul.f32 %v569, 0.6931472
    %v571 = vmul.f32 -0.5, %v480
    %v572 = vadd.f32 %v571, 1.0
    %v573 = vmul.f32 %v572, %v480
    %v574 = vand.u32 2147483647, %v480
    %vm575 = vcmp.lt.f32.partialorder %v574, 0.0004427343
    %v576 = vsel %vm575, %v573, %v570
    %v577 = vadd.f32 %v482, 1.0
    %v578 = vlog2.pop %v577
    %v579 = vmul.f32 %v578, 0.6931472
    %v580 = vmul.f32 -0.5, %v482
    %v581 = vadd.f32 %v580, 1.0
    %v582 = vmul.f32 %v581, %v482
    %v583 = vand.u32 2147483647, %v482
    %vm584 = vcmp.lt.f32.partialorder %v583, 0.0004427343
    %v585 = vsel %vm584, %v582, %v579
    %v586 = vadd.f32 %v484, 1.0
    %v587 = vlog2.pop %v586
    %v588 = vmul.f32 %v587, 0.6931472
    %v589 = vmul.f32 -0.5, %v484
    %v590 = vadd.f32 %v589, 1.0
    %v591 = vmul.f32 %v590, %v484
    %v592 = vand.u32 2147483647, %v484
    %vm593 = vcmp.lt.f32.partialorder %v592, 0.0004427343
    %v594 = vsel %vm593, %v591, %v588
    %v595 = vadd.f32 %v486, 1.0
    %v596 = vlog2.pop %v595
    %v597 = vmul.f32 %v596, 0.6931472
    %v598 = vmul.f32 -0.5, %v486
    %v599 = vadd.f32 %v598, 1.0
    %v600 = vmul.f32 %v599, %v486
    %v601 = vand.u32 2147483647, %v486
    %vm602 = vcmp.lt.f32.partialorder %v601, 0.0004427343
    %v603 = vsel %vm602, %v600, %v597
    %v604 = vadd.f32 %v488, 1.0
    %v605 = vlog2.pop %v604
    %v606 = vmul.f32 %v605, 0.6931472
    %v607 = vmul.f32 -0.5, %v488
    %v608 = vadd.f32 %v607, 1.0
    %v609 = vmul.f32 %v608, %v488
    %v610 = vand.u32 2147483647, %v488
    %vm611 = vcmp.lt.f32.partialorder %v610, 0.0004427343
    %v612 = vsel %vm611, %v609, %v606
    %v613 = vadd.f32 %v490, 1.0
    %v614 = vlog2.pop %v613
    %v615 = vmul.f32 %v614, 0.6931472
    %v616 = vmul.f32 -0.5, %v490
    %v617 = vadd.f32 %v616, 1.0
    %v618 = vmul.f32 %v617, %v490
    %v619 = vand.u32 2147483647, %v490
    %vm620 = vcmp.lt.f32.partialorder %v619, 0.0004427343
    %v621 = vsel %vm620, %v618, %v615
    %v622 = vadd.f32 %v492, 1.0
    %v623 = vlog2.pop %v622
    %v624 = vmul.f32 %v623, 0.6931472
    %v625 = vmul.f32 -0.5, %v492
    %v626 = vadd.f32 %v625, 1.0
    %v627 = vmul.f32 %v626, %v492
    %v628 = vand.u32 2147483647, %v492
    %vm629 = vcmp.lt.f32.partialorder %v628, 0.0004427343
    %v630 = vsel %vm629, %v627, %v624
    %v631 = vadd.f32 %v494, 1.0
    %v632 = vlog2.pop %v631
    %v633 = vmul.f32 %v632, 0.6931472
    %v634 = vmul.f32 -0.5, %v494
    %v635 = vadd.f32 %v634, 1.0
    %v636 = vmul.f32 %v635, %v494
    %v637 = vand.u32 2147483647, %v494
    %vm638 = vcmp.lt.f32.partialorder %v637, 0.0004427343
    %v639 = vsel %vm638, %v636, %v633
    %v640 = vadd.f32 %v496, 1.0
    %v641 = vlog2.pop %v640
    %v642 = vmul.f32 %v641, 0.6931472
    %v643 = vmul.f32 -0.5, %v496
    %v644 = vadd.f32 %v643, 1.0
    %v645 = vmul.f32 %v644, %v496
    %v646 = vand.u32 2147483647, %v496
    %vm647 = vcmp.lt.f32.partialorder %v646, 0.0004427343
    %v648 = vsel %vm647, %v645, %v642
    %v649 = vadd.f32 %v498, 1.0
    %v650 = vlog2.pop %v649
    %v651 = vmul.f32 %v650, 0.6931472
    %v652 = vmul.f32 -0.5, %v498
    %v653 = vadd.f32 %v652, 1.0
    %v654 = vmul.f32 %v653, %v498
    %v655 = vand.u32 2147483647, %v498
    %vm656 = vcmp.lt.f32.partialorder %v655, 0.0004427343
    %v657 = vsel %vm656, %v654, %v651
    %v658 = vadd.f32 %v500, 1.0
    %v659 = vlog2.pop %v658
    %v660 = vmul.f32 %v659, 0.6931472
    %v661 = vmul.f32 -0.5, %v500
    %v662 = vadd.f32 %v661, 1.0
    %v663 = vmul.f32 %v662, %v500
    %v664 = vand.u32 2147483647, %v500
    %vm665 = vcmp.lt.f32.partialorder %v664, 0.0004427343
    %v666 = vsel %vm665, %v663, %v660
    %v667 = vadd.f32 %v502, 1.0
    %v668 = vlog2.pop %v667
    %v669 = vmul.f32 %v668, 0.6931472
    %v670 = vmul.f32 -0.5, %v502
    %v671 = vadd.f32 %v670, 1.0
    %v672 = vmul.f32 %v671, %v502
    %v673 = vand.u32 2147483647, %v502
    %vm674 = vcmp.lt.f32.partialorder %v673, 0.0004427343
    %v675 = vsel %vm674, %v672, %v669
    %v676 = vadd.f32 %v504, 1.0
    %v677 = vlog2.pop %v676
    %v678 = vmul.f32 %v677, 0.6931472
    %v679 = vmul.f32 -0.5, %v504
    %v680 = vadd.f32 %v679, 1.0
    %v681 = vmul.f32 %v680, %v504
    %v682 = vand.u32 2147483647, %v504
    %vm683 = vcmp.lt.f32.partialorder %v682, 0.0004427343
    %v684 = vsel %vm683, %v681, %v678
    %v685 = vsub.f32 %v405, %v513
    %v686 = vsub.f32 %v406, %v522
    %v687 = vsub.f32 %v407, %v531
    %v688 = vsub.f32 %v408, %v540
    %v689 = vsub.f32 %v409, %v549
    %v690 = vsub.f32 %v410, %v558
    %v691 = vsub.f32 %v411, %v567
    %v692 = vsub.f32 %v412, %v576
    %v693 = vsub.f32 %v413, %v585
    %v694 = vsub.f32 %v414, %v594
    %v695 = vsub.f32 %v415, %v603
    %v696 = vsub.f32 %v416, %v612
    %v697 = vsub.f32 %v417, %v621
    %v698 = vsub.f32 %v418, %v630
    %v699 = vsub.f32 %v419, %v639
    %v700 = vsub.f32 %v420, %v648
    %v701 = vsub.f32 %v421, %v657
    %v702 = vsub.f32 %v422, %v666
    %v703 = vsub.f32 %v423, %v675
    %v704 = vsub.f32 %v424, %v684
    %v705 = vsub.f32 0.0, %v685
    %v706 = vsub.f32 0.0, %v686
    %v707 = vsub.f32 0.0, %v687
    %v708 = vsub.f32 0.0, %v688
    %v709 = vsub.f32 0.0, %v689
    %v710 = vsub.f32 0.0, %v690
    %v711 = vsub.f32 0.0, %v691
    %v712 = vsub.f32 0.0, %v692
    %v713 = vsub.f32 0.0, %v693
    %v714 = vsub.f32 0.0, %v694
    %v715 = vsub.f32 0.0, %v695
    %v716 = vsub.f32 0.0, %v696
    %v717 = vsub.f32 0.0, %v697
    %v718 = vsub.f32 0.0, %v698
    %v719 = vsub.f32 0.0, %v699
    %v720 = vsub.f32 0.0, %v700
    %v721 = vsub.f32 0.0, %v701
    %v722 = vsub.f32 0.0, %v702
    %v723 = vsub.f32 0.0, %v703
    %v724 = vsub.f32 0.0, %v704
    %v725 = vld [vmem:[%s2] sm:$0xff]
    %v726 = vld [vmem:[%s2 + $0x8] sm:$0xff]
    %v727 = vld [vmem:[%s2 + $0x10] sm:$0xff]
    %v728 = vld [vmem:[%s2 + $0x18] sm:$0xff]
    %v729 = vld [vmem:[%s2 + $0x20] sm:$0xff]
    %v730 = vld [vmem:[%s2 + $0x28] sm:$0xff]
    %v731 = vld [vmem:[%s2 + $0x30] sm:$0xff]
    %v732 = vld [vmem:[%s2 + $0x38] sm:$0xff]
    %v733 = vld [vmem:[%s2 + $0x40] sm:$0xff]
    %v734 = vld [vmem:[%s2 + $0x48] sm:$0xff]
    %v735 = vld [vmem:[%s2 + $0x50] sm:$0xff]
    %v736 = vld [vmem:[%s2 + $0x58] sm:$0xff]
    %v737 = vld [vmem:[%s2 + $0x60] sm:$0xff]
    %v738 = vld [vmem:[%s2 + $0x68] sm:$0xff]
    %v739 = vld [vmem:[%s2 + $0x70] sm:$0xff]
    %v740 = vld [vmem:[%s2 + $0x78] sm:$0xff]
    %v741 = vld [vmem:[%s2 + $0x80] sm:$0xff]
    %v742 = vld [vmem:[%s2 + $0x88] sm:$0xff]
    %v743 = vld [vmem:[%s2 + $0x90] sm:$0xff]
    %v744 = vld [vmem:[%s2 + $0x98] sm:$0xff]
    %v745 = vmul.f32 %v725, %v705
    %v746 = vmul.f32 %v726, %v706
    %v747 = vmul.f32 %v727, %v707
    %v748 = vmul.f32 %v728, %v708
    %v749 = vmul.f32 %v729, %v709
    %v750 = vmul.f32 %v730, %v710
    %v751 = vmul.f32 %v731, %v711
    %v752 = vmul.f32 %v732, %v712
    %v753 = vmul.f32 %v733, %v713
    %v754 = vmul.f32 %v734, %v714
    %v755 = vmul.f32 %v735, %v715
    %v756 = vmul.f32 %v736, %v716
    %v757 = vmul.f32 %v737, %v717
    %v758 = vmul.f32 %v738, %v718
    %v759 = vmul.f32 %v739, %v719
    %v760 = vmul.f32 %v740, %v720
    %v761 = vmul.f32 %v741, %v721
    %v762 = vmul.f32 %v742, %v722
    %v763 = vmul.f32 %v743, %v723
    %v764 = vmul.f32 %v744, %v724
    %v765 = vadd.f32 %v745, %v746
    %v766 = vadd.f32 %v765, %v747
    %v767 = vadd.f32 %v766, %v748
    %v768 = vadd.f32 %v767, %v749
    %v769 = vadd.f32 %v768, %v750
    %v770 = vadd.f32 %v769, %v751
    %v771 = vadd.f32 %v770, %v752
    %v772 = vadd.f32 %v771, %v753
    %v773 = vadd.f32 %v772, %v754
    %v774 = vadd.f32 %v773, %v755
    %v775 = vadd.f32 %v774, %v756
    %v776 = vadd.f32 %v775, %v757
    %v777 = vadd.f32 %v776, %v758
    %v778 = vadd.f32 %v777, %v759
    %v779 = vadd.f32 %v778, %v760
    %v780 = vadd.f32 %v779, %v761
    %v781 = vadd.f32 %v780, %v762
    %v782 = vadd.f32 %v781, %v763
    %v783 = vadd.f32 %v782, %v764
    %v784 = vrot.slane %v783, 4
    %v785 = vadd.f32 %v783, %v784
    %v786 = vrot.slane %v785, 2
    %v787 = vadd.f32 %v785, %v786
    %v788 = vrot.slane %v787, 1
    %v789 = vadd.f32 %v787, %v788
    %790 = vst [vmem:[#allocation2] sm:$0x1] %v789
    // Predicated region
    $region14: #{cbow_forward.1} parent=1 // pred_check
      _
    $region15: #{cbow_forward.1} parent=1 // pred_check_branch
      %792 = sbr.rel (0) target = $region17
    $region16: #{cbow_forward.1} parent=1 // pred_region
      %s794 = ssub.s32 16, 16
      %795 = vsyncadd [#allocation3], %s794
      %s797 = sshll.u32 [#allocation2], 4
      %s798 = int_to_ptr.vmem [resolvable:$true] %s797
      %800 = dma.vmem_to_hbm [thread:$0]  %s798, 16, %s3, [#allocation3]
    $region17: #{cbow_forward.1} parent=1 // pred_fallthru
      _
    // Predicated region
    $region18: #{cbow_forward.1} parent=1 // pred_check
      _
    $region19: #{cbow_forward.1} parent=1 // pred_check_branch
      %802 = sbr.rel (0) target = $region21
    $region20: #{cbow_forward.1} parent=1 // pred_region
      %803 = dma.done [#allocation3], 16
    $region21: #{cbow_forward.1} parent=1 // pred_fallthru
      _
    %804 = vsyncpa [#allocation3], 1

</llo_original>
